<compile_context>
chip_gen: v7x
topology: tpu7x:2x2x1
jax: 0.10.0
libtpu: 0.0.40
codegen_flags: <defaults>
</compile_context>

<pallas_src>
import jax
import jax.numpy as jnp
from jax.experimental import pallas as pl
from jax.experimental.pallas import tpu as pltpu

LANE = 128     # lane width (last-dim tile)
SUBLANE = 8    # f32 sublane width (second-to-last-dim tile)


def _act(name, x):
    if name == "relu":
        return jnp.maximum(x, 0.0)
    if name == "tanh":
        return jnp.tanh(x)
    if name == "identity":
        return x
    raise ValueError(f"unknown activation {name}")


def _round_up(n, m):
    return ((n + m - 1) // m) * m


# ----------------------------- kernel ----------------------------------------


def make_ddpg_kernel(activations, h_pad):
    act1, act2 = activations

    def ddpg_kernel(
        s_ref,              # [TB, obs]
        w_s_ref, b_s_ref,   # fused s-LHS layer (actor-l1 | critic-l1 s-part): [obs, 2*h_pad], [1, 2*h_pad]
        wa2_ref, ba2_ref,   # actor layer 2: [h_pad, a_pad], [1, a_pad]
        wc1a_ref,           # critic layer-1 action part: [a_pad, h_pad]
        wc2_ref, bc2_ref,   # critic layer 2: [h_pad, out_pad], [1, out_pad]
        q_ref,              # [TB, out_pad]
    ):
        s = s_ref[...]

        # One wide matmul for both layers that consume s as LHS, then split on a
        # 128-lane boundary (no re-layout).
        h = jnp.dot(s, w_s_ref[...], preferred_element_type=jnp.float32) + b_s_ref[...]
        h_a = _act(act1, h[:, :h_pad])          # actor hidden
        h_cs = h[:, h_pad:]                     # critic hidden, s-contribution (+ bc1)

        # actor head
        a = _act(
            act2,
            jnp.dot(h_a, wa2_ref[...], preferred_element_type=jnp.float32) + ba2_ref[...],
        )

        # critic: concat([s, a]) @ Wc1 == s @ Wc1[:obs] + a @ Wc1[obs:]  (split matmul)
        h_c = _act(
            act1,
            h_cs + jnp.dot(a, wc1a_ref[...], preferred_element_type=jnp.float32),
        )
        q = _act(
            act2,
            jnp.dot(h_c, wc2_ref[...], preferred_element_type=jnp.float32) + bc2_ref[...],
        )

        q_ref[...] = q.astype(q_ref.dtype)

    return ddpg_kernel


# ----------------------------- wrapper ----------------------------------------


def ddpg_forward(s, kparams, activations, out_dim, *, tile_b=256):
    """Fused actor+critic forward. s: [B, obs] (f32). Returns [B, out_dim]."""
    B, obs = s.shape
    h_pad = kparams["wa2"].shape[0]
    out_pad = kparams["wc2"].shape[1]

    # Batch tile: multiple of 8 sublanes; cap at tile_b for VMEM friendliness on v7x
    # (64 MiB physical / 32 MiB scoped default -- this config uses ~1 MiB).
    tb = min(tile_b, _round_up(B, SUBLANE))
    grid = (pl.cdiv(B, tb),)

    def resident(arr):  # weight/bias stays VMEM-resident across all grid steps
        return pl.BlockSpec(arr.shape, lambda i: (0, 0))

    q_pad = pl.pallas_call(
        make_ddpg_kernel(activations, h_pad),
        out_shape=jax.ShapeDtypeStruct((B, out_pad), jnp.float32),
        grid=grid,
        in_specs=[
            pl.BlockSpec((tb, obs), lambda i: (i, 0)),   # s: tiled over batch
            resident(kparams["w_s"]), resident(kparams["b_s"]),
            resident(kparams["wa2"]), resident(kparams["ba2"]),
            resident(kparams["wc1a"]),
            resident(kparams["wc2"]), resident(kparams["bc2"]),
        ],
        out_specs=pl.BlockSpec((tb, out_pad), lambda i: (i, 0)),
        compiler_params=pltpu.CompilerParams(
            dimension_semantics=("parallel",),           # megacore sharding on v7x
        ),
    )(
        s,
        kparams["w_s"], kparams["b_s"],
        kparams["wa2"], kparams["ba2"],
        kparams["wc1a"],
        kparams["wc2"], kparams["bc2"],
    )
    # Slice the lane-padded head back to the logical output width (outside the kernel).
    return q_pad[:, :out_dim]


# ----------------------------- params ----------------------------------------


def init_params(key, sizes):
    """Deterministic PyTorch-style Linear init (uniform +-1/sqrt(fan_in)), unpadded."""
    obs_dim, hid_dim, act_dim = sizes
    out_dim = act_dim  # critic output dim = sizes[-1] (same `sizes` as actor)

    def linear(key, fan_in, fan_out):
        kw, kb = jax.random.split(key)
        bound = 1.0 / jnp.sqrt(jnp.float32(fan_in))
        w = jax.random.uniform(kw, (fan_in, fan_out), jnp.float32, -bound, bound)
        b = jax.random.uniform(kb, (1, fan_out), jnp.float32, -bound, bound)
        return w, b

    keys = jax.random.split(key, 4)
    wa1, ba1 = linear(keys[0], obs_dim, hid_dim)
    wa2, ba2 = linear(keys[1], hid_dim, act_dim)
    # critic layer 1 takes concat([s, a]) of width obs_dim + act_dim
    wc1, bc1 = linear(keys[2], obs_dim + act_dim, hid_dim)
    wc2, bc2 = linear(keys[3], hid_dim, out_dim)

    return {
        "wa1": wa1, "ba1": ba1,
        "wa2": wa2, "ba2": ba2,
        "wc1s": wc1[:obs_dim], "wc1a": wc1[obs_dim:], "bc1": bc1,
        "wc2": wc2, "bc2": bc2,
    }


def prepare_kernel_params(params):
    """Zero-pads feature dims to 128 lanes and fuses the two s-LHS weights.

    Exactness: padded weight rows/cols and biases are zero, and relu(0)=tanh(0)=0,
    so padded lanes stay identically zero through the whole network and are sliced
    off after the kernel.
    """
    def pad2(x, r, c):
        return jnp.pad(x, ((0, r - x.shape[0]), (0, c - x.shape[1])))

    obs = params["wa1"].shape[0]
    hid = params["wa1"].shape[1]
    act = params["wa2"].shape[1]
    out = params["wc2"].shape[1]
    h_pad, a_pad, out_pad = (_round_up(d, LANE) for d in (hid, act, out))

    # Fuse actor-l1 and critic-l1 (s part): one [obs, 2*h_pad] weight, one wide matmul.
    w_s = jnp.concatenate(
        [pad2(params["wa1"], obs, h_pad), pad2(params["wc1s"], obs, h_pad)], axis=1
    )
    b_s = jnp.concatenate(
        [pad2(params["ba1"], 1, h_pad), pad2(params["bc1"], 1, h_pad)], axis=1
    )

    return {
        "w_s": w_s, "b_s": b_s,
        "wa2": pad2(params["wa2"], h_pad, a_pad),
        "ba2": pad2(params["ba2"], 1, a_pad),
        "wc1a": pad2(params["wc1a"], a_pad, h_pad),
        "wc2": pad2(params["wc2"], h_pad, out_pad),
        "bc2": pad2(params["bc2"], 1, out_pad),
    }


# ----------------------------- reference --------------------------------------


def ddpg_forward_ref(s, params, activations):
    """Pure-JAX reference of the same semantics (actor MLP, concat, critic MLP)."""
    act1, act2 = activations
    h = _act(act1, s @ params["wa1"] + params["ba1"])
    a = _act(act2, h @ params["wa2"] + params["ba2"])
    sa = jnp.concatenate([s, a], axis=1)
    wc1 = jnp.concatenate([params["wc1s"], params["wc1a"]], axis=0)
    hc = _act(act1, sa @ wc1 + params["bc1"])
    return _act(act2, hc @ params["wc2"] + params["bc2"])


# ----------------------------- main --------------------------------------------


if __name__ == "__main__":
    # sizes = [obs_dim, hidden, act_dim], activations applied after each linear
    sizes = (16, 32, 8)
    activations = ("relu", "tanh")
    out_dim = sizes[-1]

    key = jax.random.PRNGKey(0)
    k_param, k_small, k_big = jax.random.split(key, 3)
    params = init_params(k_param, sizes)
    kparams = prepare_kernel_params(params)

    # Small-batch check (batch=2: single partially-valid batch tile).
    s_small = jax.random.normal(k_small, (2, sizes[0]), jnp.float32)
    q_small = jax.block_until_ready(ddpg_forward(s_small, kparams, activations, out_dim))
    q_small_ref = ddpg_forward_ref(s_small, params, activations)
    assert q_small.shape == (2, out_dim)
    assert jnp.allclose(q_small, q_small_ref, atol=1e-5, rtol=1e-5)

    # Larger-batch check exercising a multi-step grid with a ragged trailing tile.
    s_big = jax.random.normal(k_big, (600, sizes[0]), jnp.float32)
    q_big = jax.block_until_ready(ddpg_forward(s_big, kparams, activations, out_dim))
    q_big_ref = ddpg_forward_ref(s_big, params, activations)
    assert q_big.shape == (600, out_dim)
    assert jnp.allclose(q_big, q_big_ref, atol=1e-5, rtol=1e-5)

    print("KERNEL_OK")
</pallas_src>

<mosaic_0001>
module attributes {stable_mosaic.version = 11 : i64} {
  func.func @ddpg_kernel(%arg0: i32, %arg1: memref<8x16xf32, #tpu.memory_space<vmem>>, %arg2: memref<16x256xf32, #tpu.memory_space<vmem>>, %arg3: memref<1x256xf32, #tpu.memory_space<vmem>>, %arg4: memref<128x128xf32, #tpu.memory_space<vmem>>, %arg5: memref<1x128xf32, #tpu.memory_space<vmem>>, %arg6: memref<128x128xf32, #tpu.memory_space<vmem>>, %arg7: memref<128x128xf32, #tpu.memory_space<vmem>>, %arg8: memref<1x128xf32, #tpu.memory_space<vmem>>, %arg9: memref<8x128xf32, #tpu.memory_space<vmem>>) attributes {dimension_semantics = [#tpu.dimension_semantics<parallel>], iteration_bounds = array<i64: 1>, scalar_prefetch = 0 : i64, scratch_operands = 0 : i64, tpu.core_type = #tpu.core_type<tc>, window_params = [{transform_indices = @transform_0, window_bounds = array<i64: 8, 16>}, {pipeline_mode = #tpu.pipeline_mode<synchronous>, transform_indices = @transform_1, window_bounds = array<i64: 16, 256>}, {pipeline_mode = #tpu.pipeline_mode<synchronous>, transform_indices = @transform_2, window_bounds = array<i64: 1, 256>}, {pipeline_mode = #tpu.pipeline_mode<synchronous>, transform_indices = @transform_3, window_bounds = array<i64: 128, 128>}, {pipeline_mode = #tpu.pipeline_mode<synchronous>, transform_indices = @transform_4, window_bounds = array<i64: 1, 128>}, {pipeline_mode = #tpu.pipeline_mode<synchronous>, transform_indices = @transform_5, window_bounds = array<i64: 128, 128>}, {pipeline_mode = #tpu.pipeline_mode<synchronous>, transform_indices = @transform_6, window_bounds = array<i64: 128, 128>}, {pipeline_mode = #tpu.pipeline_mode<synchronous>, transform_indices = @transform_7, window_bounds = array<i64: 1, 128>}, {transform_indices = @transform_8, window_bounds = array<i64: 8, 128>}]} {
    %c0 = arith.constant 0 : index
    %c0_0 = arith.constant 0 : index
    %0 = vector.load %arg1[%c0, %c0_0] : memref<8x16xf32, #tpu.memory_space<vmem>>, vector<8x16xf32>
    %c0_1 = arith.constant 0 : index
    %c0_2 = arith.constant 0 : index
    %1 = vector.load %arg2[%c0_1, %c0_2] : memref<16x256xf32, #tpu.memory_space<vmem>>, vector<16x256xf32>
    %cst = arith.constant dense<0.000000e+00> : vector<8x256xf32>
    %2 = tpu.matmul %0, %1, %cst {dimension_numbers = #tpu.dot_dimension_numbers<[1], [0], [0], [1], [0, 0, 1, 1], [], []>} : vector<8x16xf32>, vector<16x256xf32>, vector<8x256xf32> -> vector<8x256xf32>
    %c0_3 = arith.constant 0 : index
    %c0_4 = arith.constant 0 : index
    %3 = vector.load %arg3[%c0_3, %c0_4] : memref<1x256xf32, #tpu.memory_space<vmem>>, vector<1x256xf32>
    %4 = vector.broadcast %3 : vector<1x256xf32> to vector<8x256xf32>
    %5 = arith.addf %2, %4 : vector<8x256xf32>
    %6 = vector.extract_strided_slice %5 {offsets = [0, 0], sizes = [8, 128], strides = [1, 1]} : vector<8x256xf32> to vector<8x128xf32>
    %cst_5 = arith.constant 0.000000e+00 : f32
    %7 = vector.broadcast %cst_5 : f32 to vector<8x128xf32>
    %8 = arith.maximumf %6, %7 : vector<8x128xf32>
    %9 = vector.extract_strided_slice %5 {offsets = [0, 128], sizes = [8, 128], strides = [1, 1]} : vector<8x256xf32> to vector<8x128xf32>
    %c0_6 = arith.constant 0 : index
    %c0_7 = arith.constant 0 : index
    %10 = vector.load %arg4[%c0_6, %c0_7] : memref<128x128xf32, #tpu.memory_space<vmem>>, vector<128x128xf32>
    %cst_8 = arith.constant dense<0.000000e+00> : vector<8x128xf32>
    %11 = tpu.matmul %8, %10, %cst_8 {dimension_numbers = #tpu.dot_dimension_numbers<[1], [0], [0], [1], [0, 0, 1, 1], [], []>} : vector<8x128xf32>, vector<128x128xf32>, vector<8x128xf32> -> vector<8x128xf32>
    %c0_9 = arith.constant 0 : index
    %c0_10 = arith.constant 0 : index
    %12 = vector.load %arg5[%c0_9, %c0_10] : memref<1x128xf32, #tpu.memory_space<vmem>>, vector<1x128xf32>
    %13 = vector.broadcast %12 : vector<1x128xf32> to vector<8x128xf32>
    %14 = arith.addf %11, %13 : vector<8x128xf32>
    %15 = math.tanh %14 : vector<8x128xf32>
    %c0_11 = arith.constant 0 : index
    %c0_12 = arith.constant 0 : index
    %16 = vector.load %arg6[%c0_11, %c0_12] : memref<128x128xf32, #tpu.memory_space<vmem>>, vector<128x128xf32>
    %cst_13 = arith.constant dense<0.000000e+00> : vector<8x128xf32>
    %17 = tpu.matmul %15, %16, %cst_13 {dimension_numbers = #tpu.dot_dimension_numbers<[1], [0], [0], [1], [0, 0, 1, 1], [], []>} : vector<8x128xf32>, vector<128x128xf32>, vector<8x128xf32> -> vector<8x128xf32>
    %18 = arith.addf %9, %17 : vector<8x128xf32>
    %cst_14 = arith.constant 0.000000e+00 : f32
    %19 = vector.broadcast %cst_14 : f32 to vector<8x128xf32>
    %20 = arith.maximumf %18, %19 : vector<8x128xf32>
    %c0_15 = arith.constant 0 : index
    %c0_16 = arith.constant 0 : index
    %21 = vector.load %arg7[%c0_15, %c0_16] : memref<128x128xf32, #tpu.memory_space<vmem>>, vector<128x128xf32>
    %cst_17 = arith.constant dense<0.000000e+00> : vector<8x128xf32>
    %22 = tpu.matmul %20, %21, %cst_17 {dimension_numbers = #tpu.dot_dimension_numbers<[1], [0], [0], [1], [0, 0, 1, 1], [], []>} : vector<8x128xf32>, vector<128x128xf32>, vector<8x128xf32> -> vector<8x128xf32>
    %c0_18 = arith.constant 0 : index
    %c0_19 = arith.constant 0 : index
    %23 = vector.load %arg8[%c0_18, %c0_19] : memref<1x128xf32, #tpu.memory_space<vmem>>, vector<1x128xf32>
    %24 = vector.broadcast %23 : vector<1x128xf32> to vector<8x128xf32>
    %25 = arith.addf %22, %24 : vector<8x128xf32>
    %26 = math.tanh %25 : vector<8x128xf32>
    %c0_20 = arith.constant 0 : index
    %c0_21 = arith.constant 0 : index
    %27 = vector.load %arg9[%c0_20, %c0_21] : memref<8x128xf32, #tpu.memory_space<vmem>>, vector<8x128xf32>
    tpu.vector_store %arg9[%c0_20, %c0_21], %26 {strides = array<i32>} : memref<8x128xf32, #tpu.memory_space<vmem>>, vector<8x128xf32>,
    return
  }
  func.func @transform_0(%arg0: i32) -> (i32, i32) {
    %c0_i32 = arith.constant 0 : i32
    %c0_i32_0 = arith.constant 0 : i32
    return %arg0, %c0_i32 : i32, i32
  }
  func.func @transform_1(%arg0: i32) -> (i32, i32) {
    %c0_i32 = arith.constant 0 : i32
    %c0_i32_0 = arith.constant 0 : i32
    %c0_i32_1 = arith.constant 0 : i32
    return %c0_i32, %c0_i32_0 : i32, i32
  }
  func.func @transform_2(%arg0: i32) -> (i32, i32) {
    %c0_i32 = arith.constant 0 : i32
    %c0_i32_0 = arith.constant 0 : i32
    %c0_i32_1 = arith.constant 0 : i32
    return %c0_i32, %c0_i32_0 : i32, i32
  }
  func.func @transform_3(%arg0: i32) -> (i32, i32) {
    %c0_i32 = arith.constant 0 : i32
    %c0_i32_0 = arith.constant 0 : i32
    %c0_i32_1 = arith.constant 0 : i32
    return %c0_i32, %c0_i32_0 : i32, i32
  }
  func.func @transform_4(%arg0: i32) -> (i32, i32) {
    %c0_i32 = arith.constant 0 : i32
    %c0_i32_0 = arith.constant 0 : i32
    %c0_i32_1 = arith.constant 0 : i32
    return %c0_i32, %c0_i32_0 : i32, i32
  }
  func.func @transform_5(%arg0: i32) -> (i32, i32) {
    %c0_i32 = arith.constant 0 : i32
    %c0_i32_0 = arith.constant 0 : i32
    %c0_i32_1 = arith.constant 0 : i32
    return %c0_i32, %c0_i32_0 : i32, i32
  }
  func.func @transform_6(%arg0: i32) -> (i32, i32) {
    %c0_i32 = arith.constant 0 : i32
    %c0_i32_0 = arith.constant 0 : i32
    %c0_i32_1 = arith.constant 0 : i32
    return %c0_i32, %c0_i32_0 : i32, i32
  }
  func.func @transform_7(%arg0: i32) -> (i32, i32) {
    %c0_i32 = arith.constant 0 : i32
    %c0_i32_0 = arith.constant 0 : i32
    %c0_i32_1 = arith.constant 0 : i32
    return %c0_i32, %c0_i32_0 : i32, i32
  }
  func.func @transform_8(%arg0: i32) -> (i32, i32) {
    %c0_i32 = arith.constant 0 : i32
    %c0_i32_0 = arith.constant 0 : i32
    return %arg0, %c0_i32 : i32, i32
  }
}

</mosaic_0001>

<llo_original>
// kernel: tpu_custom_call.1
$region0: #{tpu_custom_call.1}
  #allocation0 [shape = 'u32[]', space=smem, size = 0x4, offset = 0x4, fixed_abs, tag = 'smem constant byte address 0x4 - core index']
  #allocation1 [shape = 'u32[144,128]{1,0:T(1,128)}', space=vmem, size = 0x12000, scoped, tag = 'internal scratch']
  %s0 = inlined_call_operand.hbm [shape: f32[2,16], index: 0, kind: input, shape index: {}]
  %s1 = inlined_call_operand.hbm [shape: f32[16,256], index: 1, kind: input, shape index: {}]
  %s2 = inlined_call_operand.vmem [shape: f32[1,256], index: 2, kind: input, shape index: {}]
  %s3 = inlined_call_operand.hbm [shape: f32[128,128], index: 3, kind: input, shape index: {}]
  %s4 = inlined_call_operand.vmem [shape: f32[1,128], index: 4, kind: input, shape index: {}]
  %s5 = inlined_call_operand.hbm [shape: f32[128,128], index: 5, kind: input, shape index: {}]
  %s6 = inlined_call_operand.hbm [shape: f32[128,128], index: 6, kind: input, shape index: {}]
  %s7 = inlined_call_operand.vmem [shape: f32[1,128], index: 7, kind: input, shape index: {}]
  %s8 = inlined_call_operand.hbm [shape: f32[2,128], index: 8, kind: output, shape index: {}]
  %s9 = sld [smem:[#allocation0]]
  $region62: #{tpu_custom_call.1} parent=0
    _
  %s11 = ssub.s32 1, %s9
  %s12 = scalar_select 0, %s11, %s9
  $region1: #{tpu_custom_call.1} parent=0
    #allocation2 [shape = 'u8[4096]{0}', space=vmem, size = 0x1000, scoped, tag = 'input window, operand 0, single buffered']
    #allocation3 [shape = 's32[1]{0}', space=sflag, size = 0x4, scoped, tag = 'scoped memory for tpu_custom_call.1']
    #allocation4 [shape = 's32[1]{0}', space=sflag, size = 0x4, scoped, tag = 'scoped memory for tpu_custom_call.1']
    #allocation5 [shape = 'u8[16384]{0}', space=vmem, size = 0x4000, scoped, tag = 'input window, operand 1, single buffered']
    #allocation6 [shape = 's32[1]{0}', space=sflag, size = 0x4, scoped, tag = 'scoped memory for tpu_custom_call.1']
    #allocation7 [shape = 'u8[65536]{0}', space=vmem, size = 0x10000, scoped, tag = 'input window, operand 3, single buffered']
    #allocation8 [shape = 'u8[65536]{0}', space=vmem, size = 0x10000, scoped, tag = 'input window, operand 5, single buffered']
    #allocation9 [shape = 's32[1]{0}', space=sflag, size = 0x4, scoped, tag = 'scoped memory for tpu_custom_call.1']
    #allocation10 [shape = 'u8[65536]{0}', space=vmem, size = 0x10000, scoped, tag = 'input window, operand 6, single buffered']
    #allocation11 [shape = 'u8[4096]{0}', space=vmem, size = 0x1000, scoped, tag = 'output window, operand 0, single buffered']
    %13 = vsyncpa [#allocation3], 0
    %14 = vsyncpa [#allocation6], 0
    %15 = vsyncpa [#allocation9], 0
    %16 = vsyncpa [#allocation4], 0
    // Predicated region
    $region2: #{tpu_custom_call.1} parent=1 // pred_check
      _
    $region3: #{tpu_custom_call.1} parent=1 // pred_check_branch
      %18 = sbr.rel (0) target = $region5
    $region4: #{tpu_custom_call.1} parent=1 // pred_region
      %s20 = ssub.s32 128, 32
      %21 = vsyncadd [#allocation3], %s20
      %s22 = sshll.u32 [#allocation2], 4
      %s23 = int_to_ptr.vmem [resolvable:$true] %s22
      %28 = dma.hbm_to_vmem [thread:$0]  %s0, 32, %s23, [#allocation3], 32, 32, 2
    $region5: #{tpu_custom_call.1} parent=1 // pred_fallthru
      _
    // Predicated region
    $region6: #{tpu_custom_call.1} parent=1 // pred_check
      _
    $region7: #{tpu_custom_call.1} parent=1 // pred_check_branch
      %30 = sbr.rel (0) target = $region9
    $region8: #{tpu_custom_call.1} parent=1 // pred_region
      %s32 = ssub.s32 512, 512
      %33 = vsyncadd [#allocation6], %s32
      %s34 = sshll.u32 [#allocation5], 4
      %s35 = int_to_ptr.vmem [resolvable:$true] %s34
      %40 = dma.hbm_to_vmem [thread:$0]  %s1, 512, %s35, [#allocation6], 256, 256, 16
    $region9: #{tpu_custom_call.1} parent=1 // pred_fallthru
      _
    // Predicated region
    $region10: #{tpu_custom_call.1} parent=1 // pred_check
      _
    $region11: #{tpu_custom_call.1} parent=1 // pred_check_branch
      %42 = sbr.rel (0) target = $region13
    $region12: #{tpu_custom_call.1} parent=1 // pred_region
      _
    $region13: #{tpu_custom_call.1} parent=1 // pred_fallthru
      _
    // Predicated region
    $region14: #{tpu_custom_call.1} parent=1 // pred_check
      _
    $region15: #{tpu_custom_call.1} parent=1 // pred_check_branch
      %44 = sbr.rel (0) target = $region17
    $region16: #{tpu_custom_call.1} parent=1 // pred_region
      %s46 = ssub.s32 2048, 2048
      %47 = vsyncadd [#allocation6], %s46
      %s48 = sshll.u32 [#allocation7], 4
      %s49 = int_to_ptr.vmem [resolvable:$true] %s48
      %54 = dma.hbm_to_vmem [thread:$0]  %s3, 2048, %s49, [#allocation6], 128, 128, 8
    $region17: #{tpu_custom_call.1} parent=1 // pred_fallthru
      _
    // Predicated region
    $region18: #{tpu_custom_call.1} parent=1 // pred_check
      _
    $region19: #{tpu_custom_call.1} parent=1 // pred_check_branch
      %56 = sbr.rel (0) target = $region21
    $region20: #{tpu_custom_call.1} parent=1 // pred_region
      _
    $region21: #{tpu_custom_call.1} parent=1 // pred_fallthru
      _
    // Predicated region
    $region22: #{tpu_custom_call.1} parent=1 // pred_check
      _
    $region23: #{tpu_custom_call.1} parent=1 // pred_check_branch
      %58 = sbr.rel (0) target = $region25
    $region24: #{tpu_custom_call.1} parent=1 // pred_region
      %s60 = ssub.s32 2048, 2048
      %61 = vsyncadd [#allocation9], %s60
      %s62 = sshll.u32 [#allocation8], 4
      %s63 = int_to_ptr.vmem [resolvable:$true] %s62
      %68 = dma.hbm_to_vmem [thread:$0]  %s5, 2048, %s63, [#allocation9], 128, 128, 8
    $region25: #{tpu_custom_call.1} parent=1 // pred_fallthru
      _
    // Predicated region
    $region26: #{tpu_custom_call.1} parent=1 // pred_check
      _
    $region27: #{tpu_custom_call.1} parent=1 // pred_check_branch
      %70 = sbr.rel (0) target = $region29
    $region28: #{tpu_custom_call.1} parent=1 // pred_region
      %s72 = ssub.s32 2048, 2048
      %73 = vsyncadd [#allocation9], %s72
      %s74 = sshll.u32 [#allocation10], 4
      %s75 = int_to_ptr.vmem [resolvable:$true] %s74
      %80 = dma.hbm_to_vmem [thread:$0]  %s6, 2048, %s75, [#allocation9], 128, 128, 8
    $region29: #{tpu_custom_call.1} parent=1 // pred_fallthru
      _
    // Predicated region
    $region30: #{tpu_custom_call.1} parent=1 // pred_check
      _
    $region31: #{tpu_custom_call.1} parent=1 // pred_check_branch
      %82 = sbr.rel (0) target = $region33
    $region32: #{tpu_custom_call.1} parent=1 // pred_region
      _
    $region33: #{tpu_custom_call.1} parent=1 // pred_fallthru
      _
    // Predicated region
    $region34: #{tpu_custom_call.1} parent=1 // pred_check
      _
    $region35: #{tpu_custom_call.1} parent=1 // pred_check_branch
      %84 = sbr.rel (0) target = $region37
    $region36: #{tpu_custom_call.1} parent=1 // pred_region
      %85 = dma.done [#allocation3], 128
    $region37: #{tpu_custom_call.1} parent=1 // pred_fallthru
      _
    // Predicated region
    $region38: #{tpu_custom_call.1} parent=1 // pred_check
      _
    $region39: #{tpu_custom_call.1} parent=1 // pred_check_branch
      %87 = sbr.rel (0) target = $region41
    $region40: #{tpu_custom_call.1} parent=1 // pred_region
      %88 = dma.done [#allocation6], 512
    $region41: #{tpu_custom_call.1} parent=1 // pred_fallthru
      _
    // Predicated region
    $region42: #{tpu_custom_call.1} parent=1 // pred_check
      _
    $region43: #{tpu_custom_call.1} parent=1 // pred_check_branch
      %90 = sbr.rel (0) target = $region45
    $region44: #{tpu_custom_call.1} parent=1 // pred_region
      %91 = dma.done [#allocation6], 2048
    $region45: #{tpu_custom_call.1} parent=1 // pred_fallthru
      _
    // Predicated region
    $region46: #{tpu_custom_call.1} parent=1 // pred_check
      _
    $region47: #{tpu_custom_call.1} parent=1 // pred_check_branch
      %93 = sbr.rel (0) target = $region49
    $region48: #{tpu_custom_call.1} parent=1 // pred_region
      %94 = dma.done [#allocation9], 2048
    $region49: #{tpu_custom_call.1} parent=1 // pred_fallthru
      _
    // Predicated region
    $region50: #{tpu_custom_call.1} parent=1 // pred_check
      _
    $region51: #{tpu_custom_call.1} parent=1 // pred_check_branch
      %96 = sbr.rel (0) target = $region53
    $region52: #{tpu_custom_call.1} parent=1 // pred_region
      %97 = dma.done [#allocation9], 2048
    $region53: #{tpu_custom_call.1} parent=1 // pred_fallthru
      _
    %v98 = vld [vmem:[#allocation2] sm:$0xff]
    %v99 = vld [vmem:[#allocation5] sm:$0xff]
    %v100 = vld [vmem:[#allocation5 + $0x8] sm:$0xff]
    %v101 = vld [vmem:[#allocation5 + $0x10] sm:$0xff]
    %v102 = vld [vmem:[#allocation5 + $0x18] sm:$0xff]
    %v103 = vld [vmem:[%s2] sm:$0x3]
    %v105 = vlaneseq
    %v106 = vshrl.u32 %v105, 7
    %v107 = vsub.s32 0, %v106
    %v108 = vrot.slane %v103, %v107
    %v109 = vlaneseq
    %v110 = vshrl.u32 %v109, 7
    %v111 = vsub.s32 1, %v110
    %v112 = vrot.slane %v103, %v111
    %vm115 = vcmask 130048
    %v117 = vsel %vm115, %v98, 0
    %119 = vmatprep.subr.mxu0 %v100
    %120 = vmatpush1.msra.mxu0 %v99
    %121 = vmatprep.subr.mxu0 %v102
    %122 = vmatpush1.msra.mxu0 %v101
    %123 = vmatprep.subr.mxu0 0.0
    %124 = vmatpush1.msra.mxu0 0.0
    %125 = vmatprep.subr.mxu0 0.0
    %126 = vmatpush1.msra.mxu0 0.0
    %127 = vmatprep.subr.mxu0 0.0
    %128 = vmatpush1.msra.mxu0 0.0
    %129 = vmatprep.subr.mxu0 0.0
    %130 = vmatpush1.msra.mxu0 0.0
    %131 = vmatprep.subr.mxu0 0.0
    %132 = vmatpush1.msra.mxu0 0.0
    %133 = vmatprep.subr.mxu0 0.0
    %134 = vmatpush1.msra.mxu0 0.0
    %135 = vmatprep.subr.mxu0 0.0
    %136 = vmatpush1.msra.mxu0 0.0
    %137 = vmatprep.subr.mxu0 0.0
    %138 = vmatpush1.msra.mxu0 0.0
    %139 = vmatprep.subr.mxu0 0.0
    %140 = vmatpush1.msra.mxu0 0.0
    %141 = vmatprep.subr.mxu0 0.0
    %142 = vmatpush1.msra.mxu0 0.0
    %143 = vmatprep.subr.mxu0 0.0
    %144 = vmatpush1.msra.mxu0 0.0
    %145 = vmatprep.subr.mxu0 0.0
    %146 = vmatpush1.msra.mxu0 0.0
    %147 = vmatprep.subr.mxu0 0.0
    %148 = vmatpush1.msra.mxu0 0.0
    %149 = vmatprep.subr.mxu0 0.0
    %150 = vmatpush1.msra.mxu0 0.0
    %151 = vmatprep.subr.mxu0 0.0
    %152 = vmatpush1.msra.mxu0 0.0
    %153 = vmatprep.subr.mxu0 0.0
    %154 = vmatpush1.msra.mxu0 0.0
    %155 = vmatprep.subr.mxu0 0.0
    %156 = vmatpush1.msra.mxu0 0.0
    %157 = vmatprep.subr.mxu0 0.0
    %158 = vmatpush1.msra.mxu0 0.0
    %159 = vmatprep.subr.mxu0 0.0
    %160 = vmatpush1.msra.mxu0 0.0
    %161 = vmatprep.subr.mxu0 0.0
    %162 = vmatpush1.msra.mxu0 0.0
    %163 = vmatprep.subr.mxu0 0.0
    %164 = vmatpush1.msra.mxu0 0.0
    %165 = vmatprep.subr.mxu0 0.0
    %166 = vmatpush1.msra.mxu0 0.0
    %167 = vmatprep.subr.mxu0 0.0
    %168 = vmatpush1.msra.mxu0 0.0
    %169 = vmatprep.subr.mxu0 0.0
    %170 = vmatpush1.msra.mxu0 0.0
    %171 = vmatprep.subr.mxu0 0.0
    %172 = vmatpush1.msra.mxu0 0.0
    %173 = vmatprep.subr.mxu0 0.0
    %174 = vmatpush1.msra.mxu0 0.0
    %175 = vmatprep.subr.mxu0 0.0
    %176 = vmatpush1.msra.mxu0 0.0
    %177 = vmatprep.subr.mxu0 0.0
    %178 = vmatpush1.msra.mxu0 0.0
    %179 = vmatprep.subr.mxu0 0.0
    %180 = vmatpush1.msra.mxu0 0.0
    %181 = vmatprep.subr.mxu0 0.0
    %182 = vmatpush1.msra.mxu0 0.0
    %183 = vmatprep.mubr.f32.mxu0 0.0
    %184 = vmatmul.mubr.f32.gmra.mrb[0].mxu0 %v117
    %v185 = vpop.f32.mrb[0].mxu0
    %v186 = vadd.f32 %v108, %v185
    %v187 = vpop.f32.mrb[0].mxu0
    %v188 = vadd.f32 %v112, %v187
    %189 = vdwg.mxu0
    %v190 = vmax.f32 %v186, 0.0
    %v191 = vld [vmem:[#allocation7] sm:$0xff]
    %v192 = vld [vmem:[#allocation7 + $0x8] sm:$0xff]
    %v193 = vld [vmem:[#allocation7 + $0x10] sm:$0xff]
    %v194 = vld [vmem:[#allocation7 + $0x18] sm:$0xff]
    %v195 = vld [vmem:[#allocation7 + $0x20] sm:$0xff]
    %v196 = vld [vmem:[#allocation7 + $0x28] sm:$0xff]
    %v197 = vld [vmem:[#allocation7 + $0x30] sm:$0xff]
    %v198 = vld [vmem:[#allocation7 + $0x38] sm:$0xff]
    %v199 = vld [vmem:[#allocation7 + $0x40] sm:$0xff]
    %v200 = vld [vmem:[#allocation7 + $0x48] sm:$0xff]
    %v201 = vld [vmem:[#allocation7 + $0x50] sm:$0xff]
    %v202 = vld [vmem:[#allocation7 + $0x58] sm:$0xff]
    %v203 = vld [vmem:[#allocation7 + $0x60] sm:$0xff]
    %v204 = vld [vmem:[#allocation7 + $0x68] sm:$0xff]
    %v205 = vld [vmem:[#allocation7 + $0x70] sm:$0xff]
    %v206 = vld [vmem:[#allocation7 + $0x78] sm:$0xff]
    %v207 = vld [vmem:[%s4] sm:$0x1]
    %v209 = vlaneseq
    %v210 = vshrl.u32 %v209, 7
    %v211 = vsub.s32 0, %v210
    %v212 = vrot.slane %v207, %v211
    %214 = vmatprep.subr.mxu0 0.0
    %215 = vmatpush1.msra.mxu0 %v191
    %216 = vmatprep.subr.mxu0 0.0
    %217 = vmatpush1.msra.mxu0 %v192
    %218 = vmatprep.subr.mxu0 0.0
    %219 = vmatpush1.msra.mxu0 %v193
    %220 = vmatprep.subr.mxu0 0.0
    %221 = vmatpush1.msra.mxu0 %v194
    %222 = vmatprep.subr.mxu0 0.0
    %223 = vmatpush1.msra.mxu0 %v195
    %224 = vmatprep.subr.mxu0 0.0
    %225 = vmatpush1.msra.mxu0 %v196
    %226 = vmatprep.subr.mxu0 0.0
    %227 = vmatpush1.msra.mxu0 %v197
    %228 = vmatprep.subr.mxu0 0.0
    %229 = vmatpush1.msra.mxu0 %v198
    %230 = vmatprep.subr.mxu0 0.0
    %231 = vmatpush1.msra.mxu0 %v199
    %232 = vmatprep.subr.mxu0 0.0
    %233 = vmatpush1.msra.mxu0 %v200
    %234 = vmatprep.subr.mxu0 0.0
    %235 = vmatpush1.msra.mxu0 %v201
    %236 = vmatprep.subr.mxu0 0.0
    %237 = vmatpush1.msra.mxu0 %v202
    %238 = vmatprep.subr.mxu0 0.0
    %239 = vmatpush1.msra.mxu0 %v203
    %240 = vmatprep.subr.mxu0 0.0
    %241 = vmatpush1.msra.mxu0 %v204
    %242 = vmatprep.subr.mxu0 0.0
    %243 = vmatpush1.msra.mxu0 %v205
    %244 = vmatprep.subr.mxu0 0.0
    %245 = vmatpush1.msra.mxu0 %v206
    %246 = vmatprep.subr.mxu0 0.0
    %247 = vmatpush1.msra.mxu0 0.0
    %248 = vmatprep.subr.mxu0 0.0
    %249 = vmatpush1.msra.mxu0 0.0
    %250 = vmatprep.subr.mxu0 0.0
    %251 = vmatpush1.msra.mxu0 0.0
    %252 = vmatprep.subr.mxu0 0.0
    %253 = vmatpush1.msra.mxu0 0.0
    %254 = vmatprep.subr.mxu0 0.0
    %255 = vmatpush1.msra.mxu0 0.0
    %256 = vmatprep.subr.mxu0 0.0
    %257 = vmatpush1.msra.mxu0 0.0
    %258 = vmatprep.subr.mxu0 0.0
    %259 = vmatpush1.msra.mxu0 0.0
    %260 = vmatprep.subr.mxu0 0.0
    %261 = vmatpush1.msra.mxu0 0.0
    %262 = vmatprep.subr.mxu0 0.0
    %263 = vmatpush1.msra.mxu0 0.0
    %264 = vmatprep.subr.mxu0 0.0
    %265 = vmatpush1.msra.mxu0 0.0
    %266 = vmatprep.subr.mxu0 0.0
    %267 = vmatpush1.msra.mxu0 0.0
    %268 = vmatprep.subr.mxu0 0.0
    %269 = vmatpush1.msra.mxu0 0.0
    %270 = vmatprep.subr.mxu0 0.0
    %271 = vmatpush1.msra.mxu0 0.0
    %272 = vmatprep.subr.mxu0 0.0
    %273 = vmatpush1.msra.mxu0 0.0
    %274 = vmatprep.subr.mxu0 0.0
    %275 = vmatpush1.msra.mxu0 0.0
    %276 = vmatprep.subr.mxu0 0.0
    %277 = vmatpush1.msra.mxu0 0.0
    %278 = vmatprep.mubr.f32.mxu0 0.0
    %279 = vmatmul.mubr.f32.gmra.mrb[0].mxu0 %v190
    %v280 = vpop.f32.mrb[0].mxu0
    %v281 = vadd.f32 %v212, %v280
    %v282 = vpop.f32.mrb[0].mxu0
    %283 = vdwg.mxu0
    %v284 = vtanh.pop %v281
    %v285 = vld [vmem:[#allocation8] sm:$0xff]
    %v286 = vld [vmem:[#allocation8 + $0x8] sm:$0xff]
    %v287 = vld [vmem:[#allocation8 + $0x10] sm:$0xff]
    %v288 = vld [vmem:[#allocation8 + $0x18] sm:$0xff]
    %v289 = vld [vmem:[#allocation8 + $0x20] sm:$0xff]
    %v290 = vld [vmem:[#allocation8 + $0x28] sm:$0xff]
    %v291 = vld [vmem:[#allocation8 + $0x30] sm:$0xff]
    %v292 = vld [vmem:[#allocation8 + $0x38] sm:$0xff]
    %v293 = vld [vmem:[#allocation8 + $0x40] sm:$0xff]
    %v294 = vld [vmem:[#allocation8 + $0x48] sm:$0xff]
    %v295 = vld [vmem:[#allocation8 + $0x50] sm:$0xff]
    %v296 = vld [vmem:[#allocation8 + $0x58] sm:$0xff]
    %v297 = vld [vmem:[#allocation8 + $0x60] sm:$0xff]
    %v298 = vld [vmem:[#allocation8 + $0x68] sm:$0xff]
    %v299 = vld [vmem:[#allocation8 + $0x70] sm:$0xff]
    %v300 = vld [vmem:[#allocation8 + $0x78] sm:$0xff]
    %301 = vmatprep.subr.mxu0 0.0
    %302 = vmatpush1.msra.mxu0 %v285
    %303 = vmatprep.subr.mxu0 0.0
    %304 = vmatpush1.msra.mxu0 %v286
    %305 = vmatprep.subr.mxu0 0.0
    %306 = vmatpush1.msra.mxu0 %v287
    %307 = vmatprep.subr.mxu0 0.0
    %308 = vmatpush1.msra.mxu0 %v288
    %309 = vmatprep.subr.mxu0 0.0
    %310 = vmatpush1.msra.mxu0 %v289
    %311 = vmatprep.subr.mxu0 0.0
    %312 = vmatpush1.msra.mxu0 %v290
    %313 = vmatprep.subr.mxu0 0.0
    %314 = vmatpush1.msra.mxu0 %v291
    %315 = vmatprep.subr.mxu0 0.0
    %316 = vmatpush1.msra.mxu0 %v292
    %317 = vmatprep.subr.mxu0 0.0
    %318 = vmatpush1.msra.mxu0 %v293
    %319 = vmatprep.subr.mxu0 0.0
    %320 = vmatpush1.msra.mxu0 %v294
    %321 = vmatprep.subr.mxu0 0.0
    %322 = vmatpush1.msra.mxu0 %v295
    %323 = vmatprep.subr.mxu0 0.0
    %324 = vmatpush1.msra.mxu0 %v296
    %325 = vmatprep.subr.mxu0 0.0
    %326 = vmatpush1.msra.mxu0 %v297
    %327 = vmatprep.subr.mxu0 0.0
    %328 = vmatpush1.msra.mxu0 %v298
    %329 = vmatprep.subr.mxu0 0.0
    %330 = vmatpush1.msra.mxu0 %v299
    %331 = vmatprep.subr.mxu0 0.0
    %332 = vmatpush1.msra.mxu0 %v300
    %333 = vmatprep.subr.mxu0 0.0
    %334 = vmatpush1.msra.mxu0 0.0
    %335 = vmatprep.subr.mxu0 0.0
    %336 = vmatpush1.msra.mxu0 0.0
    %337 = vmatprep.subr.mxu0 0.0
    %338 = vmatpush1.msra.mxu0 0.0
    %339 = vmatprep.subr.mxu0 0.0
    %340 = vmatpush1.msra.mxu0 0.0
    %341 = vmatprep.subr.mxu0 0.0
    %342 = vmatpush1.msra.mxu0 0.0
    %343 = vmatprep.subr.mxu0 0.0
    %344 = vmatpush1.msra.mxu0 0.0
    %345 = vmatprep.subr.mxu0 0.0
    %346 = vmatpush1.msra.mxu0 0.0
    %347 = vmatprep.subr.mxu0 0.0
    %348 = vmatpush1.msra.mxu0 0.0
    %349 = vmatprep.subr.mxu0 0.0
    %350 = vmatpush1.msra.mxu0 0.0
    %351 = vmatprep.subr.mxu0 0.0
    %352 = vmatpush1.msra.mxu0 0.0
    %353 = vmatprep.subr.mxu0 0.0
    %354 = vmatpush1.msra.mxu0 0.0
    %355 = vmatprep.subr.mxu0 0.0
    %356 = vmatpush1.msra.mxu0 0.0
    %357 = vmatprep.subr.mxu0 0.0
    %358 = vmatpush1.msra.mxu0 0.0
    %359 = vmatprep.subr.mxu0 0.0
    %360 = vmatpush1.msra.mxu0 0.0
    %361 = vmatprep.subr.mxu0 0.0
    %362 = vmatpush1.msra.mxu0 0.0
    %363 = vmatprep.subr.mxu0 0.0
    %364 = vmatpush1.msra.mxu0 0.0
    %365 = vmatprep.mubr.f32.mxu0 0.0
    %366 = vmatmul.mubr.f32.gmra.mrb[0].mxu0 %v284
    %v367 = vpop.f32.mrb[0].mxu0
    %v368 = vadd.f32 0.0, %v367
    %v369 = vpop.f32.mrb[0].mxu0
    %370 = vdwg.mxu0
    %v371 = vadd.f32 %v188, %v368
    %v372 = vmax.f32 %v371, 0.0
    %v373 = vld [vmem:[#allocation10] sm:$0xff]
    %v374 = vld [vmem:[#allocation10 + $0x8] sm:$0xff]
    %v375 = vld [vmem:[#allocation10 + $0x10] sm:$0xff]
    %v376 = vld [vmem:[#allocation10 + $0x18] sm:$0xff]
    %v377 = vld [vmem:[#allocation10 + $0x20] sm:$0xff]
    %v378 = vld [vmem:[#allocation10 + $0x28] sm:$0xff]
    %v379 = vld [vmem:[#allocation10 + $0x30] sm:$0xff]
    %v380 = vld [vmem:[#allocation10 + $0x38] sm:$0xff]
    %v381 = vld [vmem:[#allocation10 + $0x40] sm:$0xff]
    %v382 = vld [vmem:[#allocation10 + $0x48] sm:$0xff]
    %v383 = vld [vmem:[#allocation10 + $0x50] sm:$0xff]
    %v384 = vld [vmem:[#allocation10 + $0x58] sm:$0xff]
    %v385 = vld [vmem:[#allocation10 + $0x60] sm:$0xff]
    %v386 = vld [vmem:[#allocation10 + $0x68] sm:$0xff]
    %v387 = vld [vmem:[#allocation10 + $0x70] sm:$0xff]
    %v388 = vld [vmem:[#allocation10 + $0x78] sm:$0xff]
    %v389 = vld [vmem:[%s7] sm:$0x1]
    %v391 = vlaneseq
    %v392 = vshrl.u32 %v391, 7
    %v393 = vsub.s32 0, %v392
    %v394 = vrot.slane %v389, %v393
    %396 = vmatprep.subr.mxu0 0.0
    %397 = vmatpush1.msra.mxu0 %v373
    %398 = vmatprep.subr.mxu0 0.0
    %399 = vmatpush1.msra.mxu0 %v374
    %400 = vmatprep.subr.mxu0 0.0
    %401 = vmatpush1.msra.mxu0 %v375
    %402 = vmatprep.subr.mxu0 0.0
    %403 = vmatpush1.msra.mxu0 %v376
    %404 = vmatprep.subr.mxu0 0.0
    %405 = vmatpush1.msra.mxu0 %v377
    %406 = vmatprep.subr.mxu0 0.0
    %407 = vmatpush1.msra.mxu0 %v378
    %408 = vmatprep.subr.mxu0 0.0
    %409 = vmatpush1.msra.mxu0 %v379
    %410 = vmatprep.subr.mxu0 0.0
    %411 = vmatpush1.msra.mxu0 %v380
    %412 = vmatprep.subr.mxu0 0.0
    %413 = vmatpush1.msra.mxu0 %v381
    %414 = vmatprep.subr.mxu0 0.0
    %415 = vmatpush1.msra.mxu0 %v382
    %416 = vmatprep.subr.mxu0 0.0
    %417 = vmatpush1.msra.mxu0 %v383
    %418 = vmatprep.subr.mxu0 0.0
    %419 = vmatpush1.msra.mxu0 %v384
    %420 = vmatprep.subr.mxu0 0.0
    %421 = vmatpush1.msra.mxu0 %v385
    %422 = vmatprep.subr.mxu0 0.0
    %423 = vmatpush1.msra.mxu0 %v386
    %424 = vmatprep.subr.mxu0 0.0
    %425 = vmatpush1.msra.mxu0 %v387
    %426 = vmatprep.subr.mxu0 0.0
    %427 = vmatpush1.msra.mxu0 %v388
    %428 = vmatprep.subr.mxu0 0.0
    %429 = vmatpush1.msra.mxu0 0.0
    %430 = vmatprep.subr.mxu0 0.0
    %431 = vmatpush1.msra.mxu0 0.0
    %432 = vmatprep.subr.mxu0 0.0
    %433 = vmatpush1.msra.mxu0 0.0
    %434 = vmatprep.subr.mxu0 0.0
    %435 = vmatpush1.msra.mxu0 0.0
    %436 = vmatprep.subr.mxu0 0.0
    %437 = vmatpush1.msra.mxu0 0.0
    %438 = vmatprep.subr.mxu0 0.0
    %439 = vmatpush1.msra.mxu0 0.0
    %440 = vmatprep.subr.mxu0 0.0
    %441 = vmatpush1.msra.mxu0 0.0
    %442 = vmatprep.subr.mxu0 0.0
    %443 = vmatpush1.msra.mxu0 0.0
    %444 = vmatprep.subr.mxu0 0.0
    %445 = vmatpush1.msra.mxu0 0.0
    %446 = vmatprep.subr.mxu0 0.0
    %447 = vmatpush1.msra.mxu0 0.0
    %448 = vmatprep.subr.mxu0 0.0
    %449 = vmatpush1.msra.mxu0 0.0
    %450 = vmatprep.subr.mxu0 0.0
    %451 = vmatpush1.msra.mxu0 0.0
    %452 = vmatprep.subr.mxu0 0.0
    %453 = vmatpush1.msra.mxu0 0.0
    %454 = vmatprep.subr.mxu0 0.0
    %455 = vmatpush1.msra.mxu0 0.0
    %456 = vmatprep.subr.mxu0 0.0
    %457 = vmatpush1.msra.mxu0 0.0
    %458 = vmatprep.subr.mxu0 0.0
    %459 = vmatpush1.msra.mxu0 0.0
    %460 = vmatprep.mubr.f32.mxu0 0.0
    %461 = vmatmul.mubr.f32.gmra.mrb[0].mxu0 %v372
    %v462 = vpop.f32.mrb[0].mxu0
    %v463 = vadd.f32 %v394, %v462
    %v464 = vpop.f32.mrb[0].mxu0
    %465 = vdwg.mxu0
    %v466 = vtanh.pop %v463
    %467 = vst [vmem:[#allocation11] sm:$0xff] %v466
    // Predicated region
    $region54: #{tpu_custom_call.1} parent=1 // pred_check
      _
    $region55: #{tpu_custom_call.1} parent=1 // pred_check_branch
      %469 = sbr.rel (0) target = $region57
    $region56: #{tpu_custom_call.1} parent=1 // pred_region
      %s471 = ssub.s32 128, 32
      %472 = vsyncadd [#allocation4], %s471
      %s473 = sshll.u32 [#allocation11], 4
      %s474 = int_to_ptr.vmem [resolvable:$true] %s473
      %479 = dma.vmem_to_hbm [thread:$0]  %s474, 32, %s8, [#allocation4], 32, 32, 2
    $region57: #{tpu_custom_call.1} parent=1 // pred_fallthru
      _
    // Predicated region
    $region58: #{tpu_custom_call.1} parent=1 // pred_check
      _
    $region59: #{tpu_custom_call.1} parent=1 // pred_check_branch
      %481 = sbr.rel (0) target = $region61
    $region60: #{tpu_custom_call.1} parent=1 // pred_region
      %482 = dma.done [#allocation4], 128
    $region61: #{tpu_custom_call.1} parent=1 // pred_fallthru
      _
    %483 = vsyncpa [#allocation3], 1
    %484 = vsyncpa [#allocation6], 1
    %485 = vsyncpa [#allocation9], 1
    %486 = vsyncpa [#allocation4], 1

</llo_original>
